<compile_context>
chip_gen: v5e
topology: v5e:2x2
jax: 0.10.0
libtpu: 0.0.40
codegen_flags: <defaults>
</compile_context>

<pallas_src>
import functools

import jax
import jax.numpy as jnp
from jax.experimental import pallas as pl
from jax.experimental.pallas import tpu as pltpu


# ----------------------------------------------------------------------------
# Kernels
# ----------------------------------------------------------------------------

def _se_fused_kernel(x_ref, w1t_ref, b1_ref, w2t_ref, b2_ref, o_ref, *, inv_hw):
    """Single pass: pool + excite + gate on a (bn, C, HW) batch tile."""
    x = x_ref[...]                                                   # (bn, C, HW)
    # AdaptiveAvgPool2d(1): lane-axis reduction with f32 accumulation.
    pooled = jnp.sum(x, axis=-1, dtype=jnp.float32) * jnp.float32(inv_hw)        # (bn, C)
    # 1x1 convs on a 1x1 map == dense layers -> batched MXU matmuls (row form).
    h = jnp.dot(pooled, w1t_ref[...], preferred_element_type=jnp.float32) + b1_ref[...]  # (bn, R)
    h = h * jax.nn.sigmoid(h)                                        # SiLU (f32)
    s = jnp.dot(h, w2t_ref[...], preferred_element_type=jnp.float32) + b2_ref[...]       # (bn, C)
    scale = jax.nn.sigmoid(s)                                        # (bn, C) f32
    # Gate: broadcast the per-channel scale over the lane-dense spatial axis.
    # Scale is rounded to x.dtype first to avoid a full-block f32 temporary
    # (tiny deviation from an all-f32 gate for bf16 inputs; tested below).
    o_ref[...] = (x * scale[:, :, None].astype(x.dtype)).astype(o_ref.dtype)


def _se_pool_excite_kernel(x_ref, w1_ref, b1_ref, w2_ref, b2_ref, scale_ref,
                           acc_ref, *, hw, hw_tile, inv_hw):
    """Two-pass, pass 1: accumulate the spatial sum over HW tiles; at the last
    tile compute the (C, 1) sigmoid scale (column-form matvecs on the MXU)."""
    t = pl.program_id(1)

    @pl.when(t == 0)
    def _():
        acc_ref[...] = jnp.zeros_like(acc_ref)

    x = x_ref[0]                                                     # (C, hw_tile)
    # Mask lanes past the true H*W: the last tile may be partial and Pallas
    # pads out-of-bounds reads with garbage.
    lane = jax.lax.broadcasted_iota(jnp.int32, x.shape, 1) + t * hw_tile
    xm = jnp.where(lane < hw, x, jnp.zeros_like(x))
    acc_ref[...] += jnp.sum(xm, axis=-1, keepdims=True, dtype=jnp.float32)       # (C, 1)

    @pl.when(t == pl.num_programs(1) - 1)
    def _():
        pooled = acc_ref[...] * jnp.float32(inv_hw)                  # (C, 1)
        h = jnp.dot(w1_ref[...], pooled, preferred_element_type=jnp.float32) + b1_ref[...]   # (R, 1)
        h = h * jax.nn.sigmoid(h)
        s = jnp.dot(w2_ref[...], h, preferred_element_type=jnp.float32) + b2_ref[...]        # (C, 1)
        scale_ref[0] = jax.nn.sigmoid(s)                             # (C, 1)


def _se_gate_kernel(scale_ref, x_ref, o_ref):
    """Two-pass, pass 2: multiply one (C, hw_tile) spatial tile by the scale."""
    x = x_ref[0]                                                     # (C, hw_tile)
    scale = scale_ref[0].astype(x.dtype)                             # (C, 1)
    o_ref[0] = (x * scale).astype(o_ref.dtype)


# ----------------------------------------------------------------------------
# Wrapper
# ----------------------------------------------------------------------------

def _tpu_vmem_capacity_bytes():
    try:
        return int(pltpu.get_tpu_info().vmem_capacity_bytes)
    except Exception:
        return 64 << 20                     # conservative (v7x-sized) fallback


def _vmem_limit(need_bytes, cap_bytes):
    # Requested scoped VMEM: what we need plus headroom for Mosaic's internal
    # scratch, never exceeding physical capacity minus headroom.
    return int(min(cap_bytes - (4 << 20), max(need_bytes + (4 << 20), 16 << 20)))


def squeeze_excitation(x, w1, b1, w2, b2, *, force_two_pass=False, hw_tile=None):
    """x: (N, C, H, W). Returns x * sigmoid(conv2(silu(conv1(avgpool(x)))))."""
    N, C, H, W = x.shape
    R = w1.shape[0]
    HW = H * W
    inv_hw = 1.0 / float(HW)
    itemsize = x.dtype.itemsize

    # (N, C, H, W) -> (N, C, HW): metadata-only reshape (no HBM pass).
    x_flat = x.reshape(N, C, HW)

    vmem_cap = _tpu_vmem_capacity_bytes()
    budget = vmem_cap - (8 << 20)                                    # headroom
    slab_bytes = C * HW * itemsize                                   # one batch row
    weight_bytes = 2 * (2 * C * R + R + C) * 4                       # double-buffered

    # ------------------ single-pass path: pick a batch tile bn ---------------
    max_fit = (budget - weight_bytes) // max(4 * slab_bytes, 1)      # in+out, 2x buffered
    bn = None
    if not force_two_pass and max_fit >= 1:
        divisors = [d for d in range(1, N + 1) if N % d == 0 and d <= max_fit]
        target = 2 << 20                                             # ~2 MiB blocks
        bn = next((d for d in divisors if d * slab_bytes >= target), divisors[-1])
        if N // bn < 2:                                              # keep >=2 grid steps
            two_step = [d for d in divisors if N // d >= 2]          # (megacore / pipeline)
            if two_step:
                bn = two_step[-1]

    if bn is not None:
        # Row-form parameters (pre-transposed -> no in-kernel transposes), f32.
        w1t = jnp.asarray(w1, jnp.float32).reshape(R, C).T           # (C, R)
        w2t = jnp.asarray(w2, jnp.float32).reshape(C, R).T           # (R, C)
        b1_row = jnp.asarray(b1, jnp.float32).reshape(1, R)
        b2_row = jnp.asarray(b2, jnp.float32).reshape(1, C)

        kernel = functools.partial(_se_fused_kernel, inv_hw=inv_hw)
        need = 4 * bn * slab_bytes + weight_bytes
        out = pl.pallas_call(
            kernel,
            out_shape=jax.ShapeDtypeStruct((N, C, HW), x.dtype),
            grid=(N // bn,),
            in_specs=[
                pl.BlockSpec((bn, C, HW), lambda i: (i, 0, 0)),      # x batch tile
                pl.BlockSpec((C, R), lambda i: (0, 0)),              # conv1 weight^T
                pl.BlockSpec((1, R), lambda i: (0, 0)),              # conv1 bias
                pl.BlockSpec((R, C), lambda i: (0, 0)),              # conv2 weight^T
                pl.BlockSpec((1, C), lambda i: (0, 0)),              # conv2 bias
            ],
            out_specs=pl.BlockSpec((bn, C, HW), lambda i: (i, 0, 0)),
            compiler_params=pltpu.CompilerParams(
                dimension_semantics=("parallel",),
                vmem_limit_bytes=_vmem_limit(need, vmem_cap),
            ),
        )(x_flat, w1t, b1_row, w2t, b2_row)
        return out.reshape(N, C, H, W)

    # ------------- two-pass path: slab too big to double-buffer --------------
    if hw_tile is None:
        # ~2 MiB input tiles; in the auto path slab_bytes >> budget/4 so this
        # is always < HW.
        hw_tile = ((2 << 20) // (C * itemsize)) // 128 * 128
        max_tile = (budget // (4 * C * itemsize)) // 128 * 128
        hw_tile = max(128, min(hw_tile, max_tile))
    num_tiles = pl.cdiv(HW, hw_tile)
    tile_bytes = C * hw_tile * itemsize

    # Column-form parameters for matvecs, f32.
    w1_f = jnp.asarray(w1, jnp.float32).reshape(R, C)
    w2_f = jnp.asarray(w2, jnp.float32).reshape(C, R)
    b1_col = jnp.asarray(b1, jnp.float32).reshape(R, 1)
    b2_col = jnp.asarray(b2, jnp.float32).reshape(C, 1)

    pool_kernel = functools.partial(_se_pool_excite_kernel, hw=HW,
                                    hw_tile=hw_tile, inv_hw=inv_hw)
    scale = pl.pallas_call(
        pool_kernel,
        out_shape=jax.ShapeDtypeStruct((N, C, 1), jnp.float32),
        grid=(N, num_tiles),
        in_specs=[
            pl.BlockSpec((1, C, hw_tile), lambda n, t: (n, 0, t)),   # x tile
            pl.BlockSpec((R, C), lambda n, t: (0, 0)),
            pl.BlockSpec((R, 1), lambda n, t: (0, 0)),
            pl.BlockSpec((C, R), lambda n, t: (0, 0)),
            pl.BlockSpec((C, 1), lambda n, t: (0, 0)),
        ],
        out_specs=pl.BlockSpec((1, C, 1), lambda n, t: (n, 0, 0)),   # resident over t
        scratch_shapes=[pltpu.VMEM((C, 1), jnp.float32)],
        compiler_params=pltpu.CompilerParams(
            dimension_semantics=("parallel", "arbitrary"),
            vmem_limit_bytes=_vmem_limit(2 * tile_bytes + weight_bytes, vmem_cap),
        ),
    )(x_flat, w1_f, b1_col, w2_f, b2_col)

    out = pl.pallas_call(
        _se_gate_kernel,
        out_shape=jax.ShapeDtypeStruct((N, C, HW), x.dtype),
        grid=(N, num_tiles),
        in_specs=[
            pl.BlockSpec((1, C, 1), lambda n, t: (n, 0, 0)),         # per-sample scale
            pl.BlockSpec((1, C, hw_tile), lambda n, t: (n, 0, t)),   # x tile
        ],
        out_specs=pl.BlockSpec((1, C, hw_tile), lambda n, t: (n, 0, t)),
        compiler_params=pltpu.CompilerParams(
            dimension_semantics=("parallel", "parallel"),
            vmem_limit_bytes=_vmem_limit(4 * tile_bytes, vmem_cap),
        ),
    )(scale, x_flat)
    return out.reshape(N, C, H, W)


# ----------------------------------------------------------------------------
# Reference + test
# ----------------------------------------------------------------------------

def _reference(x, w1, b1, w2, b2):
    xf = x.astype(jnp.float32)
    pooled = jnp.mean(xf, axis=(2, 3))                               # (N, C)
    h = pooled @ w1.T + b1                                           # (N, R)
    h = h * jax.nn.sigmoid(h)                                        # SiLU
    s = h @ w2.T + b2                                                # (N, C)
    scale = jax.nn.sigmoid(s)[:, :, None, None]
    return xf * scale


if __name__ == "__main__":
    key = jax.random.PRNGKey(0)

    def make_inputs(k, N, C, R, H, W, dtype):
        kx, k1, k2, k3, k4 = jax.random.split(k, 5)
        x = jax.random.normal(kx, (N, C, H, W), dtype=jnp.float32).astype(dtype)
        w1 = jax.random.normal(k1, (R, C), dtype=jnp.float32) * 0.1
        b1 = jax.random.normal(k2, (R,), dtype=jnp.float32) * 0.1
        w2 = jax.random.normal(k3, (C, R), dtype=jnp.float32) * 0.1
        b2 = jax.random.normal(k4, (C,), dtype=jnp.float32) * 0.1
        return x, w1, b1, w2, b2

    cases = [
        # primary shape
        (dict(N=2, C=4, R=2, H=16, W=16), jnp.float32, {}, dict(atol=1e-5, rtol=1e-5)),
        # HW = 49 (not a multiple of 128): exercises the unpadded full-dim block
        (dict(N=2, C=8, R=4, H=7, W=7), jnp.float32, {}, dict(atol=1e-5, rtol=1e-5)),
        # bf16 gate path (scale rounded to bf16 before the multiply)
        (dict(N=2, C=16, R=4, H=14, W=14), jnp.bfloat16, {}, dict(atol=3e-2, rtol=3e-2)),
        # force the two-pass (pool + gate) fallback with a partial last HW tile
        (dict(N=2, C=8, R=4, H=14, W=14), jnp.float32,
         dict(force_two_pass=True, hw_tile=128), dict(atol=1e-5, rtol=1e-5)),
    ]

    for i, (dims, dtype, kwargs, tol) in enumerate(cases):
        key, sub = jax.random.split(key)
        x, w1, b1, w2, b2 = make_inputs(sub, dims["N"], dims["C"], dims["R"],
                                        dims["H"], dims["W"], dtype)
        y = squeeze_excitation(x, w1, b1, w2, b2, **kwargs)
        y = jax.block_until_ready(y)
        y_ref = _reference(x, w1, b1, w2, b2)
        assert jnp.allclose(y.astype(jnp.float32), y_ref, **tol), f"mismatch in case {i}"

    print("KERNEL_OK")
</pallas_src>

<mosaic_0001>
module attributes {stable_mosaic.version = 11 : i64} {
  func.func @_se_fused_kernel(%arg0: i32, %arg1: memref<1x4x256xf32, #tpu.memory_space<vmem>>, %arg2: memref<4x2xf32, #tpu.memory_space<vmem>>, %arg3: memref<1x2xf32, #tpu.memory_space<vmem>>, %arg4: memref<2x4xf32, #tpu.memory_space<vmem>>, %arg5: memref<1x4xf32, #tpu.memory_space<vmem>>, %arg6: memref<1x4x256xf32, #tpu.memory_space<vmem>>) attributes {dimension_semantics = [#tpu.dimension_semantics<parallel>], iteration_bounds = array<i64: 2>, scalar_prefetch = 0 : i64, scratch_operands = 0 : i64, tpu.core_type = #tpu.core_type<tc>, window_params = [{transform_indices = @transform_0, window_bounds = array<i64: 1, 4, 256>}, {pipeline_mode = #tpu.pipeline_mode<synchronous>, transform_indices = @transform_1, window_bounds = array<i64: 4, 2>}, {pipeline_mode = #tpu.pipeline_mode<synchronous>, transform_indices = @transform_2, window_bounds = array<i64: 1, 2>}, {pipeline_mode = #tpu.pipeline_mode<synchronous>, transform_indices = @transform_3, window_bounds = array<i64: 2, 4>}, {pipeline_mode = #tpu.pipeline_mode<synchronous>, transform_indices = @transform_4, window_bounds = array<i64: 1, 4>}, {transform_indices = @transform_5, window_bounds = array<i64: 1, 4, 256>}]} {
    %c0 = arith.constant 0 : index
    %c0_0 = arith.constant 0 : index
    %c0_1 = arith.constant 0 : index
    %0 = vector.load %arg1[%c0, %c0_0, %c0_1] : memref<1x4x256xf32, #tpu.memory_space<vmem>>, vector<1x4x256xf32>
    %cst = arith.constant dense<0.000000e+00> : vector<1x4xf32>
    %1 = vector.multi_reduction <add>, %0, %cst [2] : vector<1x4x256xf32> to vector<1x4xf32>
    %cst_2 = arith.constant 3.906250e-03 : f32
    %2 = vector.broadcast %cst_2 : f32 to vector<1x4xf32>
    %3 = arith.mulf %1, %2 : vector<1x4xf32>
    %c0_3 = arith.constant 0 : index
    %c0_4 = arith.constant 0 : index
    %4 = vector.load %arg2[%c0_3, %c0_4] : memref<4x2xf32, #tpu.memory_space<vmem>>, vector<4x2xf32>
    %cst_5 = arith.constant dense<0.000000e+00> : vector<1x2xf32>
    %5 = tpu.matmul %3, %4, %cst_5 {dimension_numbers = #tpu.dot_dimension_numbers<[1], [0], [0], [1], [0, 0, 1, 1], [], []>} : vector<1x4xf32>, vector<4x2xf32>, vector<1x2xf32> -> vector<1x2xf32>
    %c0_6 = arith.constant 0 : index
    %c0_7 = arith.constant 0 : index
    %6 = vector.load %arg3[%c0_6, %c0_7] : memref<1x2xf32, #tpu.memory_space<vmem>>, vector<1x2xf32>
    %7 = arith.addf %5, %6 : vector<1x2xf32>
    %8 = arith.negf %7 : vector<1x2xf32>
    %9 = math.exp %8 : vector<1x2xf32>
    %cst_8 = arith.constant 1.000000e+00 : f32
    %10 = vector.broadcast %cst_8 : f32 to vector<1x2xf32>
    %11 = arith.addf %10, %9 : vector<1x2xf32>
    %12 = arith.divf %10, %11 : vector<1x2xf32>
    %13 = arith.mulf %7, %12 : vector<1x2xf32>
    %c0_9 = arith.constant 0 : index
    %c0_10 = arith.constant 0 : index
    %14 = vector.load %arg4[%c0_9, %c0_10] : memref<2x4xf32, #tpu.memory_space<vmem>>, vector<2x4xf32>
    %cst_11 = arith.constant dense<0.000000e+00> : vector<1x4xf32>
    %15 = tpu.matmul %13, %14, %cst_11 {dimension_numbers = #tpu.dot_dimension_numbers<[1], [0], [0], [1], [0, 0, 1, 1], [], []>} : vector<1x2xf32>, vector<2x4xf32>, vector<1x4xf32> -> vector<1x4xf32>
    %c0_12 = arith.constant 0 : index
    %c0_13 = arith.constant 0 : index
    %16 = vector.load %arg5[%c0_12, %c0_13] : memref<1x4xf32, #tpu.memory_space<vmem>>, vector<1x4xf32>
    %17 = arith.addf %15, %16 : vector<1x4xf32>
    %18 = arith.negf %17 : vector<1x4xf32>
    %19 = math.exp %18 : vector<1x4xf32>
    %cst_14 = arith.constant 1.000000e+00 : f32
    %20 = vector.broadcast %cst_14 : f32 to vector<1x4xf32>
    %21 = arith.addf %20, %19 : vector<1x4xf32>
    %22 = arith.divf %20, %21 : vector<1x4xf32>
    %23 = vector.shape_cast %22 : vector<1x4xf32> to vector<1x4x1xf32>
    %24 = vector.broadcast %23 : vector<1x4x1xf32> to vector<1x4x256xf32>
    %25 = arith.mulf %0, %24 : vector<1x4x256xf32>
    %c0_15 = arith.constant 0 : index
    %c0_16 = arith.constant 0 : index
    %c0_17 = arith.constant 0 : index
    %26 = vector.load %arg6[%c0_15, %c0_16, %c0_17] : memref<1x4x256xf32, #tpu.memory_space<vmem>>, vector<1x4x256xf32>
    tpu.vector_store %arg6[%c0_15, %c0_16, %c0_17], %25 {strides = array<i32>} : memref<1x4x256xf32, #tpu.memory_space<vmem>>, vector<1x4x256xf32>,
    return
  }
  func.func @transform_0(%arg0: i32) -> (i32, i32, i32) {
    %c0_i32 = arith.constant 0 : i32
    %c0_i32_0 = arith.constant 0 : i32
    %c0_i32_1 = arith.constant 0 : i32
    return %arg0, %c0_i32, %c0_i32_0 : i32, i32, i32
  }
  func.func @transform_1(%arg0: i32) -> (i32, i32) {
    %c0_i32 = arith.constant 0 : i32
    %c0_i32_0 = arith.constant 0 : i32
    %c0_i32_1 = arith.constant 0 : i32
    return %c0_i32, %c0_i32_0 : i32, i32
  }
  func.func @transform_2(%arg0: i32) -> (i32, i32) {
    %c0_i32 = arith.constant 0 : i32
    %c0_i32_0 = arith.constant 0 : i32
    %c0_i32_1 = arith.constant 0 : i32
    return %c0_i32, %c0_i32_0 : i32, i32
  }
  func.func @transform_3(%arg0: i32) -> (i32, i32) {
    %c0_i32 = arith.constant 0 : i32
    %c0_i32_0 = arith.constant 0 : i32
    %c0_i32_1 = arith.constant 0 : i32
    return %c0_i32, %c0_i32_0 : i32, i32
  }
  func.func @transform_4(%arg0: i32) -> (i32, i32) {
    %c0_i32 = arith.constant 0 : i32
    %c0_i32_0 = arith.constant 0 : i32
    %c0_i32_1 = arith.constant 0 : i32
    return %c0_i32, %c0_i32_0 : i32, i32
  }
  func.func @transform_5(%arg0: i32) -> (i32, i32, i32) {
    %c0_i32 = arith.constant 0 : i32
    %c0_i32_0 = arith.constant 0 : i32
    %c0_i32_1 = arith.constant 0 : i32
    return %arg0, %c0_i32, %c0_i32_0 : i32, i32, i32
  }
}

</mosaic_0001>

<llo_original>
// kernel: tpu_custom_call.1
$region0: #{tpu_custom_call.1}
  #allocation0 [shape = 'u32[]', space=smem, size = 0x4, offset = 0x4, fixed_abs, tag = 'smem constant byte address 0x4 - core index']
  #allocation1 [shape = 'u32[72,128]{1,0:T(1,128)}', space=vmem, size = 0x9000, scoped, tag = 'internal scratch']
  %s0 = inlined_call_operand.hbm [shape: f32[2,4,256], index: 0, kind: input, shape index: {}]
  %s1 = inlined_call_operand.vmem [shape: f32[4,2], index: 1, kind: input, shape index: {}]
  %s2 = inlined_call_operand.vmem [shape: f32[1,2], index: 2, kind: input, shape index: {}]
  %s3 = inlined_call_operand.vmem [shape: f32[2,4], index: 3, kind: input, shape index: {}]
  %s4 = inlined_call_operand.vmem [shape: f32[1,4], index: 4, kind: input, shape index: {}]
  %s5 = inlined_call_operand.hbm [shape: f32[2,4,256], index: 5, kind: output, shape index: {}]
  %s6 = sld [smem:[#allocation0]]
  $region57: #{tpu_custom_call.1} parent=0
    _
  %s8 = ssub.s32 1, %s6
  %s9 = scalar_select 0, %s8, %s6
  $region1: #{tpu_custom_call.1} parent=0
    #allocation2 [shape = 'u8[8192]{0}', space=vmem, size = 0x2000, scoped, tag = 'input window, operand 0']
    #allocation3 [shape = 's32[2]{0}', space=sflag, size = 0x8, scoped, tag = 'scoped memory for tpu_custom_call.1']
    #allocation4 [shape = 's32[2]{0}', space=sflag, size = 0x8, scoped, tag = 'scoped memory for tpu_custom_call.1']
    #allocation5 [shape = 'u8[8192]{0}', space=vmem, size = 0x2000, scoped, tag = 'output window, operand 0']
    %10 = vsyncpa [#allocation3], 0
    %s11 = scalar_lea.sflag [#allocation3], 1
    %12 = vsyncpa %s11, 0
    %13 = vsyncpa [#allocation4], 0
    %s14 = scalar_lea.sflag [#allocation4], 1
    %15 = vsyncpa %s14, 0
    loop: start=0, step=1, limit=4
    $region2: #{tpu_custom_call.1} parent=1 // loop_pre_header
      _
    $region3: #{tpu_custom_call.1} parent=1 // loop_header
      %s17 = sphi 0, %s21
      %p18 = scmp.ge.s32.totalorder %s17, 4
      %s27 = sphi 0, %s29
      %s30 = sphi 0, %s27
      %s31 = sphi 0, %s30
      %s47 = sphi 0, %s31
      %s51 = sphi 0, %s51
      %s53 = sphi 0, %s51
      %s54 = sphi 0, %s53
      %s68 = sphi 0, %s54
      %s72 = sphi 0, %s72
      %s74 = sphi 0, %s72
      %s75 = sphi 0, %s74
      %s89 = sphi 0, %s75
      %s93 = sphi 0, %s93
      %s95 = sphi 0, %s93
      %s96 = sphi 0, %s95
      %s110 = sphi 0, %s96
      %s114 = sphi 0, %s114
      %s116 = sphi 0, %s114
      %s117 = sphi 0, %s116
      %s131 = sphi 0, %s117
      %s137 = sphi 0, %s139
      %s140 = sphi 0, %s137
      %s141 = sphi 0, %s140
      %s157 = sphi 0, %s141
    $region4: #{tpu_custom_call.1} parent=1 // loop_header_branch
      %20 = sbr.rel (%p18) target = $region8
    $region5: #{tpu_custom_call.1} parent=1 // loop_body
      %s22 = ssub.s32 %s17, 1
      %s23 = ssub.s32 %s17, 2
      %s24 = sadd.s32 %s17, 1
      %s25 = ssub.s32 %s17, %s24
      %p26 = scmp.eq.s32.totalorder %s25, 0
      %s28 = sadd.s32 %s27, 1
      %s29 = scalar_select %p26, %s27, %s28
      %p32 = pneg %p26
      %p33 = scmp.eq.s32.totalorder %s17, 1
      %p34 = por %p32, %p33
      %p35 = scmp.ne.s32.totalorder %s27, %s30
      %p36 = scmp.eq.s32.totalorder %s17, 0
      %p37 = por %p35, %p36
      %p38 = scmp.ne.s32.totalorder %s27, %s30
      %p39 = scmp.eq.s32.totalorder %s22, 1
      %p40 = por %p38, %p39
      %p41 = scmp.ne.s32.totalorder %s30, %s31
      %p42 = scmp.eq.s32.totalorder %s22, 0
      %p43 = por %p41, %p42
      %p44 = scmp.ne.s32.totalorder %s30, %s31
      %p45 = scmp.eq.s32.totalorder %s23, 1
      %p46 = por %p44, %p45
      %p48 = scmp.ne.s32.totalorder %s31, %s47
      %p49 = scmp.eq.s32.totalorder %s23, 0
      %p50 = por %p48, %p49
      %s52 = sadd.s32 %s51, 1
      %p55 = scmp.eq.s32.totalorder %s17, 1
      %p56 = scmp.ne.s32.totalorder %s51, %s53
      %p57 = scmp.eq.s32.totalorder %s17, 0
      %p58 = por %p56, %p57
      %p59 = scmp.ne.s32.totalorder %s51, %s53
      %p60 = scmp.eq.s32.totalorder %s22, 1
      %p61 = por %p59, %p60
      %p62 = scmp.ne.s32.totalorder %s53, %s54
      %p63 = scmp.eq.s32.totalorder %s22, 0
      %p64 = por %p62, %p63
      %p65 = scmp.ne.s32.totalorder %s53, %s54
      %p66 = scmp.eq.s32.totalorder %s23, 1
      %p67 = por %p65, %p66
      %p69 = scmp.ne.s32.totalorder %s54, %s68
      %p70 = scmp.eq.s32.totalorder %s23, 0
      %p71 = por %p69, %p70
      %s73 = sadd.s32 %s72, 1
      %p76 = scmp.eq.s32.totalorder %s17, 1
      %p77 = scmp.ne.s32.totalorder %s72, %s74
      %p78 = scmp.eq.s32.totalorder %s17, 0
      %p79 = por %p77, %p78
      %p80 = scmp.ne.s32.totalorder %s72, %s74
      %p81 = scmp.eq.s32.totalorder %s22, 1
      %p82 = por %p80, %p81
      %p83 = scmp.ne.s32.totalorder %s74, %s75
      %p84 = scmp.eq.s32.totalorder %s22, 0
      %p85 = por %p83, %p84
      %p86 = scmp.ne.s32.totalorder %s74, %s75
      %p87 = scmp.eq.s32.totalorder %s23, 1
      %p88 = por %p86, %p87
      %p90 = scmp.ne.s32.totalorder %s75, %s89
      %p91 = scmp.eq.s32.totalorder %s23, 0
      %p92 = por %p90, %p91
      %s94 = sadd.s32 %s93, 1
      %p97 = scmp.eq.s32.totalorder %s17, 1
      %p98 = scmp.ne.s32.totalorder %s93, %s95
      %p99 = scmp.eq.s32.totalorder %s17, 0
      %p100 = por %p98, %p99
      %p101 = scmp.ne.s32.totalorder %s93, %s95
      %p102 = scmp.eq.s32.totalorder %s22, 1
      %p103 = por %p101, %p102
      %p104 = scmp.ne.s32.totalorder %s95, %s96
      %p105 = scmp.eq.s32.totalorder %s22, 0
      %p106 = por %p104, %p105
      %p107 = scmp.ne.s32.totalorder %s95, %s96
      %p108 = scmp.eq.s32.totalorder %s23, 1
      %p109 = por %p107, %p108
      %p111 = scmp.ne.s32.totalorder %s96, %s110
      %p112 = scmp.eq.s32.totalorder %s23, 0
      %p113 = por %p111, %p112
      %s115 = sadd.s32 %s114, 1
      %p118 = scmp.eq.s32.totalorder %s17, 1
      %p119 = scmp.ne.s32.totalorder %s114, %s116
      %p120 = scmp.eq.s32.totalorder %s17, 0
      %p121 = por %p119, %p120
      %p122 = scmp.ne.s32.totalorder %s114, %s116
      %p123 = scmp.eq.s32.totalorder %s22, 1
      %p124 = por %p122, %p123
      %p125 = scmp.ne.s32.totalorder %s116, %s117
      %p126 = scmp.eq.s32.totalorder %s22, 0
      %p127 = por %p125, %p126
      %p128 = scmp.ne.s32.totalorder %s116, %s117
      %p129 = scmp.eq.s32.totalorder %s23, 1
      %p130 = por %p128, %p129
      %p132 = scmp.ne.s32.totalorder %s117, %s131
      %p133 = scmp.eq.s32.totalorder %s23, 0
      %p134 = por %p132, %p133
      %s135 = ssub.s32 %s17, %s24
      %p136 = scmp.eq.s32.totalorder %s135, 0
      %s138 = sadd.s32 %s137, 1
      %s139 = scalar_select %p136, %s137, %s138
      %p142 = pneg %p136
      %p143 = scmp.eq.s32.totalorder %s17, 1
      %p144 = por %p142, %p143
      %p145 = scmp.ne.s32.totalorder %s137, %s140
      %p146 = scmp.eq.s32.totalorder %s17, 0
      %p147 = por %p145, %p146
      %p148 = scmp.ne.s32.totalorder %s137, %s140
      %p149 = scmp.eq.s32.totalorder %s22, 1
      %p150 = por %p148, %p149
      %p151 = scmp.ne.s32.totalorder %s140, %s141
      %p152 = scmp.eq.s32.totalorder %s22, 0
      %p153 = por %p151, %p152
      %p154 = scmp.ne.s32.totalorder %s140, %s141
      %p155 = scmp.eq.s32.totalorder %s23, 1
      %p156 = por %p154, %p155
      %p158 = scmp.ne.s32.totalorder %s141, %s157
      %p159 = scmp.eq.s32.totalorder %s23, 0
      %p160 = por %p158, %p159
      %p161 = scmp.le.s32.totalorder 1, %s17
      %p162 = scmp.lt.s32.totalorder %s17, 3
      %p163 = pnand %p161, %p162
      %p164 = pneg %p163
      // Predicated region
      $region9: #{tpu_custom_call.1} parent=5 // pred_check
        _
      $region10: #{tpu_custom_call.1} parent=5 // pred_check_branch
        %166 = sbr.rel (%p163) target = $region12
      $region11: #{tpu_custom_call.1} parent=5 // pred_region
        %s167 = ssub.s32 %s17, 1
        // Predicated region
        $region13: #{tpu_custom_call.1} parent=11 // pred_check
          %p168 = pneg %p64
        $region14: #{tpu_custom_call.1} parent=11 // pred_check_branch
          %170 = sbr.rel (%p168) target = $region16
        $region15: #{tpu_custom_call.1} parent=11 // pred_region
          _
        $region16: #{tpu_custom_call.1} parent=11 // pred_fallthru
          _
        // Predicated region
        $region17: #{tpu_custom_call.1} parent=11 // pred_check
          %p171 = pneg %p85
        $region18: #{tpu_custom_call.1} parent=11 // pred_check_branch
          %173 = sbr.rel (%p171) target = $region20
        $region19: #{tpu_custom_call.1} parent=11 // pred_region
          _
        $region20: #{tpu_custom_call.1} parent=11 // pred_fallthru
          _
        // Predicated region
        $region21: #{tpu_custom_call.1} parent=11 // pred_check
          %p174 = pneg %p106
        $region22: #{tpu_custom_call.1} parent=11 // pred_check_branch
          %176 = sbr.rel (%p174) target = $region24
        $region23: #{tpu_custom_call.1} parent=11 // pred_region
          _
        $region24: #{tpu_custom_call.1} parent=11 // pred_fallthru
          _
        // Predicated region
        $region25: #{tpu_custom_call.1} parent=11 // pred_check
          %p177 = pneg %p127
        $region26: #{tpu_custom_call.1} parent=11 // pred_check_branch
          %179 = sbr.rel (%p177) target = $region28
        $region27: #{tpu_custom_call.1} parent=11 // pred_region
          _
        $region28: #{tpu_custom_call.1} parent=11 // pred_fallthru
          _
      $region12: #{tpu_custom_call.1} parent=5 // pred_fallthru
        _
      %p180 = scmp.lt.s32.totalorder %s17, 2
      // Predicated region
      $region29: #{tpu_custom_call.1} parent=5 // pred_check
        %p181 = pneg %p180
      $region30: #{tpu_custom_call.1} parent=5 // pred_check_branch
        %183 = sbr.rel (%p181) target = $region32
      $region31: #{tpu_custom_call.1} parent=5 // pred_region
        // Predicated region
        $region33: #{tpu_custom_call.1} parent=31 // pred_check
          %p184 = pneg %p37
        $region34: #{tpu_custom_call.1} parent=31 // pred_check_branch
          %186 = sbr.rel (%p184) target = $region36
        $region35: #{tpu_custom_call.1} parent=31 // pred_region
          %s187 = sand.u32 %s27, 1
          %s188 = scalar_lea.sflag [#allocation3], %s187
          %s189 = sand.u32 %s27, 1
          %s190 = smul.addr %s189, 8
          %s191 = scalar_lea.vmem [#allocation2], %s190
          %193 = vsyncadd %s188, 0
          %s194 = smul.addr %s17, 2
          %s195 = smul.addr %s194, 4
          %s196 = scalar_lea.hbm %s0, %s195
          %s198 = sshll.u32 %s196, 4
          %s199 = int_to_ptr.hbm [resolvable:$true] %s198
          %s200 = sshll.u32 %s191, 4
          %s201 = int_to_ptr.vmem [resolvable:$true] %s200
          %203 = dma.hbm_to_vmem [thread:$0]  %s199, 128, %s201, %s188
        $region36: #{tpu_custom_call.1} parent=31 // pred_fallthru
          _
      $region32: #{tpu_custom_call.1} parent=5 // pred_fallthru
        _
      %p204 = scmp.le.s32.totalorder 1, %s17
      %p205 = scmp.lt.s32.totalorder %s17, 3
      %p206 = pnand %p204, %p205
      %p207 = pneg %p206
      // Predicated region
      $region37: #{tpu_custom_call.1} parent=5 // pred_check
        _
      $region38: #{tpu_custom_call.1} parent=5 // pred_check_branch
        %209 = sbr.rel (%p206) target = $region40
      $region39: #{tpu_custom_call.1} parent=5 // pred_region
        %s210 = ssub.s32 %s17, 1
        %s211 = sand.u32 %s30, 1
        %s212 = scalar_lea.sflag [#allocation3], %s211
        %s213 = sand.u32 %s30, 1
        %s214 = smul.addr %s213, 8
        %s215 = scalar_lea.vmem [#allocation2], %s214
        // Predicated region
        $region41: #{tpu_custom_call.1} parent=39 // pred_check
          %p216 = pneg %p43
        $region42: #{tpu_custom_call.1} parent=39 // pred_check_branch
          %218 = sbr.rel (%p216) target = $region44
        $region43: #{tpu_custom_call.1} parent=39 // pred_region
          %220 = dma.done %s212, 128
        $region44: #{tpu_custom_call.1} parent=39 // pred_fallthru
          _
        %s221 = sand.u32 %s30, 1
        %s222 = scalar_lea.sflag [#allocation3], %s221
        %s223 = sand.u32 %s30, 1
        %s224 = smul.addr %s223, 8
        %s225 = scalar_lea.vmem [#allocation2], %s224
        %p226 = pneg %p43
        %p227 = pneg %p40
        %p228 = pneg %p64
        %p229 = pneg %p61
        %p230 = pneg %p85
        %p231 = pneg %p82
        %p232 = pneg %p106
        %p233 = pneg %p103
        %p234 = pneg %p127
        %p235 = pneg %p124
        %p236 = pneg %p153
        %p237 = pneg %p150
        %s238 = sand.u32 %s140, 1
        %s239 = scalar_lea.sflag [#allocation4], %s238
        %s240 = sand.u32 %s140, 1
        %s241 = smul.addr %s240, 8
        %s242 = scalar_lea.vmem [#allocation5], %s241
        %v243 = vld [vmem:[%s215] sm:$0xff]
        %245 = vst [vmem:[#allocation1] ss:$2 sm:$0xff] %v243
        %v246 = vld.sshfl [vmem:[#allocation1] sm:$0xff pattern:$0x75316420]
        %v247 = vld.sshfl [vmem:[#allocation1 + $0x8] sm:$0xff pattern:$0x75316420]
        %vm250 = vcmask 1043456
        %v251 = vsel %vm250, %v246, 0.0
        %v252 = vsel %vm250, %v247, 0.0
        %v253 = vadd.f32 %v251, %v252
        %254 = vadd.xlane.f32.xlu0 %v253
        %v255 = vpop.xlane.xlu0 %254
        %v256 = vmul.f32 %v255, 0.00390625
        %v257 = vld [vmem:[%s1] sm:$0xf]
        %v258 = vld [vmem:[%s2] sm:$0x1]
        %v260 = vlaneseq
        %v261 = vand.u32 %v260, 127
        %v262 = vperm.slane %v256, %v261
        %vm263 = vcmask 31744
        %v264 = vsel %vm263, %v262, 0
        %v267 = vsel %vm250, %v257, 0
        %269 = vmatpush.msra.mxu0 0.0
        %270 = vmatpush.msra.mxu0 0.0
        %271 = vmatpush.msra.mxu0 0.0
        %272 = vmatpush.msra.mxu0 0.0
        %273 = vmatpush.msra.mxu0 0.0
        %274 = vmatpush.msra.mxu0 0.0
        %275 = vmatpush.msra.mxu0 0.0
        %276 = vmatpush.msra.mxu0 0.0
        %277 = vmatpush.msra.mxu0 0.0
        %278 = vmatpush.msra.mxu0 0.0
        %279 = vmatpush.msra.mxu0 0.0
        %280 = vmatpush.msra.mxu0 0.0
        %281 = vmatpush.msra.mxu0 0.0
        %282 = vmatpush.msra.mxu0 0.0
        %283 = vmatpush.msra.mxu0 0.0
        %284 = vmatpush.msra.mxu0 %v267
        %285 = vmatmul.f32.gmra.mxu0 %v264
        %v286 = vpop.f32.mrf.mxu0
        %v287 = vadd.f32 %v258, %v286
        %288 = vdwg.mxu0
        %v289 = vxor.u32 %v287, 2147483648
        %v290 = vmul.f32 %v289, 1.442695
        %v291 = vpow.pop %v290
        %v292 = vadd.f32 %v291, 1.0
        %v293 = vrcp.pop %v292
        %v294 = vmul.f32 %v292, %v293
        %v295 = vsub.f32 1.0, %v294
        %v296 = vmul.f32 %v293, %v295
        %v297 = vadd.f32 %v293, %v296
        %vm298 = vweird.f32 %v292
        %vm299 = vweird.f32 %v293
        %vm300 = vmor %vm298, %vm299
        %v301 = vsel %vm300, %v293, %v297
        %v302 = vand.u32 2147483647, %v292
        %vm303 = vcmp.eq.f32.partialorder %v302, 8.507059e+37
        %v304 = vand.u32 %v292, 2147483648
        %v305 = vor.u32 1.1754944e-38, %v304
        %v306 = vsel %vm303, %v305, %v301
        %v307 = vmul.f32 1.0, %v306
        %v308 = vmul.f32 %v287, %v307
        %v309 = vld [vmem:[%s3] sm:$0x3]
        %v310 = vld [vmem:[%s4] sm:$0x1]
        %vm311 = vcmask 15360
        %v313 = vsel %vm311, %v308, 0
        %vm315 = vcmask 1041408
        %v317 = vsel %vm315, %v309, 0
        %319 = vmatpush.msra.mxu0 0.0
        %320 = vmatpush.msra.mxu0 0.0
        %321 = vmatpush.msra.mxu0 0.0
        %322 = vmatpush.msra.mxu0 0.0
        %323 = vmatpush.msra.mxu0 0.0
        %324 = vmatpush.msra.mxu0 0.0
        %325 = vmatpush.msra.mxu0 0.0
        %326 = vmatpush.msra.mxu0 0.0
        %327 = vmatpush.msra.mxu0 0.0
        %328 = vmatpush.msra.mxu0 0.0
        %329 = vmatpush.msra.mxu0 0.0
        %330 = vmatpush.msra.mxu0 0.0
        %331 = vmatpush.msra.mxu0 0.0
        %332 = vmatpush.msra.mxu0 0.0
        %333 = vmatpush.msra.mxu0 0.0
        %334 = vmatpush.msra.mxu0 %v317
        %335 = vmatmul.f32.gmra.mxu0 %v313
        %v336 = vpop.f32.mrf.mxu0
        %v337 = vadd.f32 %v310, %v336
        %338 = vdwg.mxu0
        %v339 = vxor.u32 %v337, 2147483648
        %v340 = vmul.f32 %v339, 1.442695
        %v341 = vpow.pop %v340
        %v342 = vadd.f32 %v341, 1.0
        %v343 = vrcp.pop %v342
        %v344 = vmul.f32 %v342, %v343
        %v345 = vsub.f32 1.0, %v344
        %v346 = vmul.f32 %v343, %v345
        %v347 = vadd.f32 %v343, %v346
        %vm348 = vweird.f32 %v342
        %vm349 = vweird.f32 %v343
        %vm350 = vmor %vm348, %vm349
        %v351 = vsel %vm350, %v343, %v347
        %v352 = vand.u32 2147483647, %v342
        %vm353 = vcmp.eq.f32.partialorder %v352, 8.507059e+37
        %v354 = vand.u32 %v342, 2147483648
        %v355 = vor.u32 1.1754944e-38, %v354
        %v356 = vsel %vm353, %v355, %v351
        %v357 = vmul.f32 1.0, %v356
        %v358 = vperm.slane %v357, 0
        %v359 = vlaneseq
        %v360 = vshrl.u32 %v359, 7
        %362 = vset.pattern.permute.xlu0 %v360
        %363 = vperm.xlu0 %362, %v358
        %v364 = vpop.permute.xlu0 %363
        %v367 = vunpack.c.l.s4 839922192
        %v368 = vunpack.c.0.s8 %v367
        %v369 = vperm.slane %v364, %v368
        %v371 = vmul.f32 %v243, %v369
        %372 = vst [vmem:[%s242] sm:$0xff] %v371
        %s373 = sand.u32 %s140, 1
        %s374 = scalar_lea.sflag [#allocation4], %s373
        %s375 = sand.u32 %s140, 1
        %s376 = smul.addr %s375, 8
        %s377 = scalar_lea.vmem [#allocation5], %s376
        // Predicated region
        $region45: #{tpu_custom_call.1} parent=39 // pred_check
          %p378 = pneg %p150
        $region46: #{tpu_custom_call.1} parent=39 // pred_check_branch
          %380 = sbr.rel (%p378) target = $region48
        $region47: #{tpu_custom_call.1} parent=39 // pred_region
          %382 = vsyncadd %s374, 0
          %s383 = smul.addr %s22, 2
          %s384 = smul.addr %s383, 4
          %s385 = scalar_lea.hbm %s5, %s384
          %s387 = sshll.u32 %s377, 4
          %s388 = int_to_ptr.vmem [resolvable:$true] %s387
          %s389 = sshll.u32 %s385, 4
          %s390 = int_to_ptr.hbm [resolvable:$true] %s389
          %392 = dma.vmem_to_hbm [thread:$0]  %s388, 128, %s390, %s374
        $region48: #{tpu_custom_call.1} parent=39 // pred_fallthru
          _
      $region40: #{tpu_custom_call.1} parent=5 // pred_fallthru
        _
      %p393 = scmp.le.s32.totalorder 2, %s17
      // Predicated region
      $region49: #{tpu_custom_call.1} parent=5 // pred_check
        %p394 = pneg %p393
      $region50: #{tpu_custom_call.1} parent=5 // pred_check_branch
        %396 = sbr.rel (%p394) target = $region52
      $region51: #{tpu_custom_call.1} parent=5 // pred_region
        %s397 = ssub.s32 %s17, 2
        // Predicated region
        $region53: #{tpu_custom_call.1} parent=51 // pred_check
          %p398 = pneg %p156
        $region54: #{tpu_custom_call.1} parent=51 // pred_check_branch
          %400 = sbr.rel (%p398) target = $region56
        $region55: #{tpu_custom_call.1} parent=51 // pred_region
          %s401 = sand.u32 %s141, 1
          %s402 = scalar_lea.sflag [#allocation4], %s401
          %s403 = sand.u32 %s141, 1
          %s404 = smul.addr %s403, 8
          %s405 = scalar_lea.vmem [#allocation5], %s404
          %407 = dma.done %s402, 128
        $region56: #{tpu_custom_call.1} parent=51 // pred_fallthru
          _
      $region52: #{tpu_custom_call.1} parent=5 // pred_fallthru
        _
    $region6: #{tpu_custom_call.1} parent=1 // loop_footer
      %s21 = sadd.s32 1, %s17
    $region7: #{tpu_custom_call.1} parent=1 // loop_footer_branch
      %16 = sbr.rel target = $region3
    $region8: #{tpu_custom_call.1} parent=1 // loop_exit
      _
    %408 = vsyncpa [#allocation3], 1
    %s409 = scalar_lea.sflag [#allocation3], 1
    %410 = vsyncpa %s409, 1
    %411 = vsyncpa [#allocation4], 1
    %s412 = scalar_lea.sflag [#allocation4], 1
    %413 = vsyncpa %s412, 1

</llo_original>
